<compile_context>
chip_gen: v6e
topology: v6e:2x2x1
jax: 0.10.0
libtpu: 0.0.40
codegen_flags: <defaults>
</compile_context>

<pallas_src>
import functools

import numpy as np
import jax
import jax.numpy as jnp
from jax import lax
from jax.experimental import pallas as pl
from jax.experimental.pallas import tpu as pltpu

# Keep both the in-kernel dots and the plain-JAX reference matmuls in full f32
# so the f32 path can be compared at tight tolerance.
jax.config.update("jax_default_matmul_precision", "float32")


def _rescnn_kernel(x_ref, w1_ref, w2_ref, bn_ref, o_ref, *,
                   kernel_size, padding, eps, mxu_dtype):
    """Fused Conv1d+BN+ReLU -> Conv1d+BN+ReLU -> residual add.

    x_ref : (B, C, L)        caller's native layout
    w*_ref: (C, K*C)         im2col-flattened weights, W[o, t*C + c] = w[o, c, t]
    bn_ref: (C, 4)           columns = [gamma1, beta1, gamma2, beta2]
    o_ref : (B, C, L)
    """
    B, C, L = x_ref.shape
    K, P = kernel_size, padding
    n_cols = B * L

    # Column index within each batch segment (reused by every tap mask).
    l_row = lax.broadcasted_iota(jnp.int32, (1, L), 1)
    l_idx = jnp.concatenate([l_row] * B, axis=1)                  # (1, B*L)

    def im2col(h2d):
        # h2d: (C, B*L) f32  ->  (K*C, B*L), zero where a tap crosses a batch edge.
        if P > 0:
            zp = jnp.zeros((C, P), jnp.float32)
            hg = jnp.concatenate([zp, h2d, zp], axis=1)           # (C, B*L + 2P)
        else:
            hg = h2d
        taps = []
        for t in range(K):                                        # static unroll over taps
            shifted = hg[:, t:t + n_cols]                         # (C, B*L)
            lo, hi = P - t, L + P - t                             # valid l range in-batch
            if lo <= 0 and hi >= L:
                taps.append(shifted)                              # middle tap: no mask
            else:
                valid = jnp.logical_and(l_idx >= lo, l_idx < hi)  # (1, B*L)
                taps.append(jnp.where(valid, shifted, 0.0))
        return jnp.concatenate(taps, axis=0)                      # (K*C, B*L)

    def conv_bn_relu(h2d, w_ref, gamma, beta):
        # Conv1d as ONE lane-dense MXU matmul: (C, K*C) @ (K*C, B*L) -> (C, B*L).
        cols = im2col(h2d)
        y = jnp.dot(w_ref[...], cols.astype(mxu_dtype),
                    preferred_element_type=jnp.float32)           # f32 accumulate
        # Training-mode BatchNorm1d: per-channel stats over the B*L columns,
        # biased variance, eps inside the rsqrt.  (Conv bias omitted: it is
        # exactly cancelled by the mean subtraction.)
        mean = jnp.mean(y, axis=1, keepdims=True)                 # (C, 1)
        var = jnp.mean((y - mean) ** 2, axis=1, keepdims=True)    # (C, 1)
        scale = gamma * lax.rsqrt(var + eps)                      # fold gamma
        shift = beta - mean * scale
        return jnp.maximum(y * scale + shift, 0.0)                # (C, B*L)

    g1, be1 = bn_ref[:, 0:1], bn_ref[:, 1:2]
    g2, be2 = bn_ref[:, 2:3], bn_ref[:, 3:4]

    # Fuse the batch into the lane (column) axis: (B, C, L) -> (C, B*L).
    x2d = jnp.concatenate([x_ref[b].astype(jnp.float32) for b in range(B)],
                          axis=1)                                 # (C, B*L)

    h = conv_bn_relu(x2d, w1_ref, g1, be1)
    h = conv_bn_relu(h, w2_ref, g2, be2)

    out2d = x2d + h                                               # residual, (C, B*L)
    for b in range(B):                                            # layout glue only
        o_ref[b] = out2d[:, b * L:(b + 1) * L].astype(o_ref.dtype)


def rescnn_forward(x, w1, b1, g1, be1, w2, b2, g2, be2, *,
                   kernel_size, padding, stride=1, eps=1e-5,
                   mxu_dtype=jnp.float32):
    """x: (B, C, L); conv weights in PyTorch layout (Cout, Cin, K)."""
    B, C_in, L = x.shape
    C_out = w1.shape[0]
    K, P = kernel_size, padding
    L_out = (L + 2 * P - K) // stride + 1
    if stride != 1 or C_in != C_out or L_out != L:
        raise ValueError("ResCNN residual requires shape-preserving convs "
                         "(stride=1, in_channels==out_channels, L preserved).")
    C = C_in
    del b1, b2  # conv bias is a no-op before training-mode BatchNorm

    # Weight-only wrapper work (tiny; no activation reshuffling / HBM passes):
    #   (Cout, Cin, K) -> (Cout, K*Cin) with flat index f = t*Cin + c.
    def flat_w(w):
        return (jnp.transpose(jnp.asarray(w, jnp.float32), (0, 2, 1))
                .reshape(C, K * C).astype(mxu_dtype))

    w1f, w2f = flat_w(w1), flat_w(w2)
    bn = jnp.stack([jnp.asarray(v, jnp.float32) for v in (g1, be1, g2, be2)],
                   axis=1)                                        # (C, 4)

    # VMEM budget: fused kernel keeps x2d, im2col columns (K*C, B*L), conv
    # output and both layer activations resident, plus pipeline buffers for
    # the (B, C, L) input/output blocks.  Budgeted against v7x's 64 MiB.
    act_bytes = B * C * L * 4
    weight_bytes = 2 * C * K * C * jnp.dtype(mxu_dtype).itemsize + 4 * C * 4
    vmem_needed = (4 + 2 * (K + 3)) * act_bytes + 2 * weight_bytes
    if vmem_needed > 40 * 1024 * 1024:
        raise ValueError("Problem too large for the fused single-step ResCNN "
                         "kernel; a tiled multi-pass variant is required.")
    vmem_limit = int(min(64 * 1024 * 1024,
                         max(2 * vmem_needed, 8 * 1024 * 1024)))

    kernel = functools.partial(_rescnn_kernel, kernel_size=K, padding=P,
                               eps=eps, mxu_dtype=mxu_dtype)

    return pl.pallas_call(
        kernel,
        out_shape=jax.ShapeDtypeStruct((B, C, L), x.dtype),
        grid_spec=pltpu.PrefetchScalarGridSpec(
            num_scalar_prefetch=0,
            grid=(1,),  # BatchNorm couples the whole batch -> single fused step
            in_specs=[
                pl.BlockSpec((B, C, L), lambda i: (0, 0, 0)),     # x, native layout
                pl.BlockSpec((C, K * C), lambda i: (0, 0)),       # conv1 weight (im2col)
                pl.BlockSpec((C, K * C), lambda i: (0, 0)),       # conv2 weight (im2col)
                pl.BlockSpec((C, 4), lambda i: (0, 0)),           # packed BN gamma/beta
            ],
            out_specs=pl.BlockSpec((B, C, L), lambda i: (0, 0, 0)),
        ),
        compiler_params=pltpu.CompilerParams(
            dimension_semantics=("arbitrary",),
            vmem_limit_bytes=vmem_limit),
    )(x, w1f, w2f, bn)


def reference_forward(x, w1, b1, g1, be1, w2, b2, g2, be2, *,
                      padding, eps=1e-5):
    """Pure-JAX transcription of the PyTorch forward (for verification)."""
    P = padding

    def conv1d(inp, w, b):
        Bq, Cin, L = inp.shape
        Cout, _, K = w.shape
        xp = jnp.pad(inp, ((0, 0), (0, 0), (P, P)))
        out = jnp.zeros((Bq, Cout, L), jnp.float32)
        for t in range(K):
            out = out + jnp.einsum('bcl,oc->bol', xp[:, :, t:t + L], w[:, :, t])
        return out + b[None, :, None]

    def bn_relu(y, g, be):
        mean = y.mean(axis=(0, 2), keepdims=True)
        var = ((y - mean) ** 2).mean(axis=(0, 2), keepdims=True)
        yn = (y - mean) / jnp.sqrt(var + eps)
        return jnp.maximum(yn * g[None, :, None] + be[None, :, None], 0.0)

    h = bn_relu(conv1d(x, w1, b1), g1, be1)
    h = bn_relu(conv1d(h, w2, b2), g2, be2)
    return x + h


if __name__ == "__main__":
    # Small shapes consistent with the module: x is [B, C, L].
    B, C, L = 2, 4, 16
    K, P, STRIDE = 3, 1, 1        # shape-preserving conv config

    key = jax.random.PRNGKey(0)
    ks = jax.random.split(key, 9)
    x = jax.random.normal(ks[0], (B, C, L), jnp.float32)
    w1 = jax.random.normal(ks[1], (C, C, K), jnp.float32) * 0.3
    b1 = jax.random.normal(ks[2], (C,), jnp.float32) * 0.1
    g1 = 1.0 + 0.1 * jax.random.normal(ks[3], (C,), jnp.float32)
    be1 = 0.1 * jax.random.normal(ks[4], (C,), jnp.float32)
    w2 = jax.random.normal(ks[5], (C, C, K), jnp.float32) * 0.3
    b2 = jax.random.normal(ks[6], (C,), jnp.float32) * 0.1
    g2 = 1.0 + 0.1 * jax.random.normal(ks[7], (C,), jnp.float32)
    be2 = 0.1 * jax.random.normal(ks[8], (C,), jnp.float32)

    ref = reference_forward(x, w1, b1, g1, be1, w2, b2, g2, be2, padding=P)

    # f32 MXU path (tight tolerance).
    out = rescnn_forward(x, w1, b1, g1, be1, w2, b2, g2, be2,
                         kernel_size=K, padding=P, stride=STRIDE)
    out = jax.block_until_ready(out)
    if not np.allclose(np.asarray(out), np.asarray(ref), atol=2e-4, rtol=2e-4):
        max_err = float(np.max(np.abs(np.asarray(out) - np.asarray(ref))))
        raise AssertionError(f"f32 Pallas kernel mismatch vs reference, max_err={max_err}")

    # bf16 MXU-input path (what v6e / v7x want for the matmuls); BN / ReLU /
    # residual stay in f32, so only matmul rounding differs (loose tolerance).
    out_bf16 = rescnn_forward(x, w1, b1, g1, be1, w2, b2, g2, be2,
                              kernel_size=K, padding=P, stride=STRIDE,
                              mxu_dtype=jnp.bfloat16)
    out_bf16 = jax.block_until_ready(out_bf16)
    if not np.allclose(np.asarray(out_bf16), np.asarray(ref), atol=1e-1, rtol=1e-1):
        max_err = float(np.max(np.abs(np.asarray(out_bf16) - np.asarray(ref))))
        raise AssertionError(f"bf16 Pallas kernel mismatch vs reference, max_err={max_err}")

    print("KERNEL_OK")
</pallas_src>

<mosaic_0001>
module attributes {stable_mosaic.version = 11 : i64} {
  func.func @_rescnn_kernel(%arg0: i32, %arg1: memref<2x4x16xf32, #tpu.memory_space<vmem>>, %arg2: memref<4x12xf32, #tpu.memory_space<vmem>>, %arg3: memref<4x12xf32, #tpu.memory_space<vmem>>, %arg4: memref<4x4xf32, #tpu.memory_space<vmem>>, %arg5: memref<2x4x16xf32, #tpu.memory_space<vmem>>) attributes {dimension_semantics = [#tpu.dimension_semantics<arbitrary>], iteration_bounds = array<i64: 1>, scalar_prefetch = 0 : i64, scratch_operands = 0 : i64, tpu.core_type = #tpu.core_type<tc>, window_params = [{pipeline_mode = #tpu.pipeline_mode<synchronous>, transform_indices = @transform_0, window_bounds = array<i64: 2, 4, 16>}, {pipeline_mode = #tpu.pipeline_mode<synchronous>, transform_indices = @transform_1, window_bounds = array<i64: 4, 12>}, {pipeline_mode = #tpu.pipeline_mode<synchronous>, transform_indices = @transform_2, window_bounds = array<i64: 4, 12>}, {pipeline_mode = #tpu.pipeline_mode<synchronous>, transform_indices = @transform_3, window_bounds = array<i64: 4, 4>}, {pipeline_mode = #tpu.pipeline_mode<synchronous>, transform_indices = @transform_4, window_bounds = array<i64: 2, 4, 16>}]} {
    %0 = tpu.iota {dimensions = array<i32: 1>} : vector<1x16xi32>
    %1 = tpu.concatenate %0, %0 in 1 : vector<1x16xi32>, vector<1x16xi32> -> vector<1x32xi32>
    %c0 = arith.constant 0 : index
    %c0_0 = arith.constant 0 : index
    %2 = vector.load %arg4[%c0, %c0_0] : memref<4x4xf32, #tpu.memory_space<vmem>>, vector<4x1xf32>
    %c0_1 = arith.constant 0 : index
    %c1 = arith.constant 1 : index
    %3 = vector.load %arg4[%c0_1, %c1] : memref<4x4xf32, #tpu.memory_space<vmem>>, vector<4x1xf32>
    %c0_2 = arith.constant 0 : index
    %c2 = arith.constant 2 : index
    %4 = vector.load %arg4[%c0_2, %c2] : memref<4x4xf32, #tpu.memory_space<vmem>>, vector<4x1xf32>
    %c0_3 = arith.constant 0 : index
    %c3 = arith.constant 3 : index
    %5 = vector.load %arg4[%c0_3, %c3] : memref<4x4xf32, #tpu.memory_space<vmem>>, vector<4x1xf32>
    %c0_4 = arith.constant 0 : index
    %c0_5 = arith.constant 0 : index
    %c0_6 = arith.constant 0 : index
    %6 = vector.load %arg1[%c0_4, %c0_5, %c0_6] : memref<2x4x16xf32, #tpu.memory_space<vmem>>, vector<1x4x16xf32>
    %7 = vector.shape_cast %6 : vector<1x4x16xf32> to vector<4x16xf32>
    %c1_7 = arith.constant 1 : index
    %c0_8 = arith.constant 0 : index
    %c0_9 = arith.constant 0 : index
    %8 = vector.load %arg1[%c1_7, %c0_8, %c0_9] : memref<2x4x16xf32, #tpu.memory_space<vmem>>, vector<1x4x16xf32>
    %9 = vector.shape_cast %8 : vector<1x4x16xf32> to vector<4x16xf32>
    %10 = tpu.concatenate %7, %9 in 1 : vector<4x16xf32>, vector<4x16xf32> -> vector<4x32xf32>
    %cst = arith.constant 0.000000e+00 : f32
    %11 = vector.broadcast %cst : f32 to vector<4x1xf32>
    %12 = tpu.concatenate %11, %10, %11 in 1 : vector<4x1xf32>, vector<4x32xf32>, vector<4x1xf32> -> vector<4x34xf32>
    %13 = vector.extract_strided_slice %12 {offsets = [0, 0], sizes = [4, 32], strides = [1, 1]} : vector<4x34xf32> to vector<4x32xf32>
    %c1_i32 = arith.constant 1 : i32
    %14 = vector.broadcast %c1_i32 : i32 to vector<1x32xi32>
    %15 = arith.cmpi sge, %1, %14 : vector<1x32xi32>
    %c17_i32 = arith.constant 17 : i32
    %16 = vector.broadcast %c17_i32 : i32 to vector<1x32xi32>
    %17 = arith.cmpi slt, %1, %16 : vector<1x32xi32>
    %18 = arith.andi %15, %17 : vector<1x32xi1>
    %cst_10 = arith.constant 0.000000e+00 : f32
    %19 = vector.shape_cast %18 : vector<1x32xi1> to vector<1x32xi1>
    %20 = vector.broadcast %19 : vector<1x32xi1> to vector<4x32xi1>
    %21 = vector.broadcast %cst_10 : f32 to vector<4x32xf32>
    %22 = arith.select %20, %13, %21 : vector<4x32xi1>, vector<4x32xf32>
    %23 = vector.extract_strided_slice %12 {offsets = [0, 1], sizes = [4, 32], strides = [1, 1]} : vector<4x34xf32> to vector<4x32xf32>
    %24 = vector.extract_strided_slice %12 {offsets = [0, 2], sizes = [4, 32], strides = [1, 1]} : vector<4x34xf32> to vector<4x32xf32>
    %c-1_i32 = arith.constant -1 : i32
    %25 = vector.broadcast %c-1_i32 : i32 to vector<1x32xi32>
    %26 = arith.cmpi sge, %1, %25 : vector<1x32xi32>
    %c15_i32 = arith.constant 15 : i32
    %27 = vector.broadcast %c15_i32 : i32 to vector<1x32xi32>
    %28 = arith.cmpi slt, %1, %27 : vector<1x32xi32>
    %29 = arith.andi %26, %28 : vector<1x32xi1>
    %cst_11 = arith.constant 0.000000e+00 : f32
    %30 = vector.shape_cast %29 : vector<1x32xi1> to vector<1x32xi1>
    %31 = vector.broadcast %30 : vector<1x32xi1> to vector<4x32xi1>
    %32 = vector.broadcast %cst_11 : f32 to vector<4x32xf32>
    %33 = arith.select %31, %24, %32 : vector<4x32xi1>, vector<4x32xf32>
    %34 = tpu.concatenate %22, %23, %33 in 0 : vector<4x32xf32>, vector<4x32xf32>, vector<4x32xf32> -> vector<12x32xf32>
    %c0_12 = arith.constant 0 : index
    %c0_13 = arith.constant 0 : index
    %35 = vector.load %arg2[%c0_12, %c0_13] : memref<4x12xf32, #tpu.memory_space<vmem>>, vector<4x12xf32>
    %cst_14 = arith.constant dense<0.000000e+00> : vector<4x32xf32>
    %36 = tpu.matmul %35, %34, %cst_14 {dimension_numbers = #tpu.dot_dimension_numbers<[1], [0], [0], [1], [0, 0, 1, 1], [], []>, precision = #tpu.contract_precision<fp32>} : vector<4x12xf32>, vector<12x32xf32>, vector<4x32xf32> -> vector<4x32xf32>
    %cst_15 = arith.constant dense<0.000000e+00> : vector<4xf32>
    %37 = vector.multi_reduction <add>, %36, %cst_15 [1] : vector<4x32xf32> to vector<4xf32>
    %38 = vector.shape_cast %37 : vector<4xf32> to vector<4x1xf32>
    %cst_16 = arith.constant 3.200000e+01 : f32
    %39 = vector.broadcast %cst_16 : f32 to vector<4x1xf32>
    %40 = arith.divf %38, %39 : vector<4x1xf32>
    %41 = vector.broadcast %40 : vector<4x1xf32> to vector<4x32xf32>
    %42 = arith.subf %36, %41 : vector<4x32xf32>
    %43 = arith.mulf %42, %42 : vector<4x32xf32>
    %cst_17 = arith.constant dense<0.000000e+00> : vector<4xf32>
    %44 = vector.multi_reduction <add>, %43, %cst_17 [1] : vector<4x32xf32> to vector<4xf32>
    %45 = vector.shape_cast %44 : vector<4xf32> to vector<4x1xf32>
    %cst_18 = arith.constant 3.200000e+01 : f32
    %46 = vector.broadcast %cst_18 : f32 to vector<4x1xf32>
    %47 = arith.divf %45, %46 : vector<4x1xf32>
    %cst_19 = arith.constant 9.99999974E-6 : f32
    %48 = vector.broadcast %cst_19 : f32 to vector<4x1xf32>
    %49 = arith.addf %47, %48 : vector<4x1xf32>
    %50 = math.rsqrt %49 : vector<4x1xf32>
    %51 = arith.mulf %2, %50 : vector<4x1xf32>
    %52 = arith.mulf %40, %51 : vector<4x1xf32>
    %53 = arith.subf %3, %52 : vector<4x1xf32>
    %54 = vector.broadcast %51 : vector<4x1xf32> to vector<4x32xf32>
    %55 = arith.mulf %36, %54 : vector<4x32xf32>
    %56 = vector.broadcast %53 : vector<4x1xf32> to vector<4x32xf32>
    %57 = arith.addf %55, %56 : vector<4x32xf32>
    %cst_20 = arith.constant 0.000000e+00 : f32
    %58 = vector.broadcast %cst_20 : f32 to vector<4x32xf32>
    %59 = arith.maximumf %57, %58 : vector<4x32xf32>
    %cst_21 = arith.constant 0.000000e+00 : f32
    %60 = vector.broadcast %cst_21 : f32 to vector<4x1xf32>
    %61 = tpu.concatenate %60, %59, %60 in 1 : vector<4x1xf32>, vector<4x32xf32>, vector<4x1xf32> -> vector<4x34xf32>
    %62 = vector.extract_strided_slice %61 {offsets = [0, 0], sizes = [4, 32], strides = [1, 1]} : vector<4x34xf32> to vector<4x32xf32>
    %c1_i32_22 = arith.constant 1 : i32
    %63 = vector.broadcast %c1_i32_22 : i32 to vector<1x32xi32>
    %64 = arith.cmpi sge, %1, %63 : vector<1x32xi32>
    %c17_i32_23 = arith.constant 17 : i32
    %65 = vector.broadcast %c17_i32_23 : i32 to vector<1x32xi32>
    %66 = arith.cmpi slt, %1, %65 : vector<1x32xi32>
    %67 = arith.andi %64, %66 : vector<1x32xi1>
    %cst_24 = arith.constant 0.000000e+00 : f32
    %68 = vector.shape_cast %67 : vector<1x32xi1> to vector<1x32xi1>
    %69 = vector.broadcast %68 : vector<1x32xi1> to vector<4x32xi1>
    %70 = vector.broadcast %cst_24 : f32 to vector<4x32xf32>
    %71 = arith.select %69, %62, %70 : vector<4x32xi1>, vector<4x32xf32>
    %72 = vector.extract_strided_slice %61 {offsets = [0, 1], sizes = [4, 32], strides = [1, 1]} : vector<4x34xf32> to vector<4x32xf32>
    %73 = vector.extract_strided_slice %61 {offsets = [0, 2], sizes = [4, 32], strides = [1, 1]} : vector<4x34xf32> to vector<4x32xf32>
    %c-1_i32_25 = arith.constant -1 : i32
    %74 = vector.broadcast %c-1_i32_25 : i32 to vector<1x32xi32>
    %75 = arith.cmpi sge, %1, %74 : vector<1x32xi32>
    %c15_i32_26 = arith.constant 15 : i32
    %76 = vector.broadcast %c15_i32_26 : i32 to vector<1x32xi32>
    %77 = arith.cmpi slt, %1, %76 : vector<1x32xi32>
    %78 = arith.andi %75, %77 : vector<1x32xi1>
    %cst_27 = arith.constant 0.000000e+00 : f32
    %79 = vector.shape_cast %78 : vector<1x32xi1> to vector<1x32xi1>
    %80 = vector.broadcast %79 : vector<1x32xi1> to vector<4x32xi1>
    %81 = vector.broadcast %cst_27 : f32 to vector<4x32xf32>
    %82 = arith.select %80, %73, %81 : vector<4x32xi1>, vector<4x32xf32>
    %83 = tpu.concatenate %71, %72, %82 in 0 : vector<4x32xf32>, vector<4x32xf32>, vector<4x32xf32> -> vector<12x32xf32>
    %c0_28 = arith.constant 0 : index
    %c0_29 = arith.constant 0 : index
    %84 = vector.load %arg3[%c0_28, %c0_29] : memref<4x12xf32, #tpu.memory_space<vmem>>, vector<4x12xf32>
    %cst_30 = arith.constant dense<0.000000e+00> : vector<4x32xf32>
    %85 = tpu.matmul %84, %83, %cst_30 {dimension_numbers = #tpu.dot_dimension_numbers<[1], [0], [0], [1], [0, 0, 1, 1], [], []>, precision = #tpu.contract_precision<fp32>} : vector<4x12xf32>, vector<12x32xf32>, vector<4x32xf32> -> vector<4x32xf32>
    %cst_31 = arith.constant dense<0.000000e+00> : vector<4xf32>
    %86 = vector.multi_reduction <add>, %85, %cst_31 [1] : vector<4x32xf32> to vector<4xf32>
    %87 = vector.shape_cast %86 : vector<4xf32> to vector<4x1xf32>
    %cst_32 = arith.constant 3.200000e+01 : f32
    %88 = vector.broadcast %cst_32 : f32 to vector<4x1xf32>
    %89 = arith.divf %87, %88 : vector<4x1xf32>
    %90 = vector.broadcast %89 : vector<4x1xf32> to vector<4x32xf32>
    %91 = arith.subf %85, %90 : vector<4x32xf32>
    %92 = arith.mulf %91, %91 : vector<4x32xf32>
    %cst_33 = arith.constant dense<0.000000e+00> : vector<4xf32>
    %93 = vector.multi_reduction <add>, %92, %cst_33 [1] : vector<4x32xf32> to vector<4xf32>
    %94 = vector.shape_cast %93 : vector<4xf32> to vector<4x1xf32>
    %cst_34 = arith.constant 3.200000e+01 : f32
    %95 = vector.broadcast %cst_34 : f32 to vector<4x1xf32>
    %96 = arith.divf %94, %95 : vector<4x1xf32>
    %cst_35 = arith.constant 9.99999974E-6 : f32
    %97 = vector.broadcast %cst_35 : f32 to vector<4x1xf32>
    %98 = arith.addf %96, %97 : vector<4x1xf32>
    %99 = math.rsqrt %98 : vector<4x1xf32>
    %100 = arith.mulf %4, %99 : vector<4x1xf32>
    %101 = arith.mulf %89, %100 : vector<4x1xf32>
    %102 = arith.subf %5, %101 : vector<4x1xf32>
    %103 = vector.broadcast %100 : vector<4x1xf32> to vector<4x32xf32>
    %104 = arith.mulf %85, %103 : vector<4x32xf32>
    %105 = vector.broadcast %102 : vector<4x1xf32> to vector<4x32xf32>
    %106 = arith.addf %104, %105 : vector<4x32xf32>
    %cst_36 = arith.constant 0.000000e+00 : f32
    %107 = vector.broadcast %cst_36 : f32 to vector<4x32xf32>
    %108 = arith.maximumf %106, %107 : vector<4x32xf32>
    %109 = arith.addf %10, %108 : vector<4x32xf32>
    %110 = vector.extract_strided_slice %109 {offsets = [0, 0], sizes = [4, 16], strides = [1, 1]} : vector<4x32xf32> to vector<4x16xf32>
    %c0_37 = arith.constant 0 : index
    %c0_38 = arith.constant 0 : index
    %c0_39 = arith.constant 0 : index
    %111 = vector.load %arg5[%c0_37, %c0_38, %c0_39] : memref<2x4x16xf32, #tpu.memory_space<vmem>>, vector<1x4x16xf32>
    %112 = vector.shape_cast %111 : vector<1x4x16xf32> to vector<4x16xf32>
    %113 = vector.shape_cast %110 : vector<4x16xf32> to vector<1x4x16xf32>
    tpu.vector_store %arg5[%c0_37, %c0_38, %c0_39], %113 {strides = array<i32>} : memref<2x4x16xf32, #tpu.memory_space<vmem>>, vector<1x4x16xf32>,
    %114 = vector.extract_strided_slice %109 {offsets = [0, 16], sizes = [4, 16], strides = [1, 1]} : vector<4x32xf32> to vector<4x16xf32>
    %c1_40 = arith.constant 1 : index
    %c0_41 = arith.constant 0 : index
    %c0_42 = arith.constant 0 : index
    %115 = vector.load %arg5[%c1_40, %c0_41, %c0_42] : memref<2x4x16xf32, #tpu.memory_space<vmem>>, vector<1x4x16xf32>
    %116 = vector.shape_cast %115 : vector<1x4x16xf32> to vector<4x16xf32>
    %117 = vector.shape_cast %114 : vector<4x16xf32> to vector<1x4x16xf32>
    tpu.vector_store %arg5[%c1_40, %c0_41, %c0_42], %117 {strides = array<i32>} : memref<2x4x16xf32, #tpu.memory_space<vmem>>, vector<1x4x16xf32>,
    return
  }
  func.func @transform_0(%arg0: i32) -> (i32, i32, i32) {
    %c0_i32 = arith.constant 0 : i32
    %c0_i32_0 = arith.constant 0 : i32
    %c0_i32_1 = arith.constant 0 : i32
    %c0_i32_2 = arith.constant 0 : i32
    return %c0_i32, %c0_i32_0, %c0_i32_1 : i32, i32, i32
  }
  func.func @transform_1(%arg0: i32) -> (i32, i32) {
    %c0_i32 = arith.constant 0 : i32
    %c0_i32_0 = arith.constant 0 : i32
    %c0_i32_1 = arith.constant 0 : i32
    return %c0_i32, %c0_i32_0 : i32, i32
  }
  func.func @transform_2(%arg0: i32) -> (i32, i32) {
    %c0_i32 = arith.constant 0 : i32
    %c0_i32_0 = arith.constant 0 : i32
    %c0_i32_1 = arith.constant 0 : i32
    return %c0_i32, %c0_i32_0 : i32, i32
  }
  func.func @transform_3(%arg0: i32) -> (i32, i32) {
    %c0_i32 = arith.constant 0 : i32
    %c0_i32_0 = arith.constant 0 : i32
    %c0_i32_1 = arith.constant 0 : i32
    return %c0_i32, %c0_i32_0 : i32, i32
  }
  func.func @transform_4(%arg0: i32) -> (i32, i32, i32) {
    %c0_i32 = arith.constant 0 : i32
    %c0_i32_0 = arith.constant 0 : i32
    %c0_i32_1 = arith.constant 0 : i32
    %c0_i32_2 = arith.constant 0 : i32
    return %c0_i32, %c0_i32_0, %c0_i32_1 : i32, i32, i32
  }
}

</mosaic_0001>

<llo_original>
// kernel: tpu_custom_call.1
$region0: #{tpu_custom_call.1}
  #allocation0 [shape = 'u32[]', space=smem, size = 0x4, offset = 0x4, fixed_abs, tag = 'smem constant byte address 0x4 - core index']
  #allocation1 [shape = 'u32[144,128]{1,0:T(1,128)}', space=vmem, size = 0x12000, scoped, tag = 'internal scratch']
  %s0 = inlined_call_operand.hbm [shape: f32[2,4,16], index: 0, kind: input, shape index: {}]
  %s1 = inlined_call_operand.hbm [shape: f32[4,12], index: 1, kind: input, shape index: {}]
  %s2 = inlined_call_operand.hbm [shape: f32[4,12], index: 2, kind: input, shape index: {}]
  %s3 = inlined_call_operand.vmem [shape: f32[4,4], index: 3, kind: input, shape index: {}]
  %s4 = inlined_call_operand.hbm [shape: f32[2,4,16], index: 4, kind: output, shape index: {}]
  %s5 = sld [smem:[#allocation0]]
  $region38: #{tpu_custom_call.1} parent=0
    _
  %s7 = ssub.s32 1, %s5
  %s8 = scalar_select 0, %s7, %s5
  $region1: #{tpu_custom_call.1} parent=0
    #allocation2 [shape = 'u8[4096]{0}', space=vmem, size = 0x1000, scoped, tag = 'input window, operand 0, single buffered']
    #allocation3 [shape = 's32[1]{0}', space=sflag, size = 0x4, scoped, tag = 'scoped memory for tpu_custom_call.1']
    #allocation4 [shape = 's32[1]{0}', space=sflag, size = 0x4, scoped, tag = 'scoped memory for tpu_custom_call.1']
    #allocation5 [shape = 'u8[2048]{0}', space=vmem, size = 0x800, scoped, tag = 'input window, operand 1, single buffered']
    #allocation6 [shape = 's32[1]{0}', space=sflag, size = 0x4, scoped, tag = 'scoped memory for tpu_custom_call.1']
    #allocation7 [shape = 'u8[2048]{0}', space=vmem, size = 0x800, scoped, tag = 'input window, operand 2, single buffered']
    #allocation8 [shape = 'u8[4096]{0}', space=vmem, size = 0x1000, scoped, tag = 'output window, operand 0, single buffered']
    %9 = vsyncpa [#allocation3], 0
    %10 = vsyncpa [#allocation6], 0
    %11 = vsyncpa [#allocation4], 0
    // Predicated region
    $region2: #{tpu_custom_call.1} parent=1 // pred_check
      _
    $region3: #{tpu_custom_call.1} parent=1 // pred_check_branch
      %13 = sbr.rel (0) target = $region5
    $region4: #{tpu_custom_call.1} parent=1 // pred_region
      %s15 = ssub.s32 128, 128
      %16 = vsyncadd [#allocation3], %s15
      %s17 = sshll.u32 [#allocation2], 4
      %s18 = int_to_ptr.vmem [resolvable:$true] %s17
      %23 = dma.hbm_to_vmem [thread:$0]  %s0, 128, %s18, [#allocation3], 64, 64, 4
    $region5: #{tpu_custom_call.1} parent=1 // pred_fallthru
      _
    // Predicated region
    $region6: #{tpu_custom_call.1} parent=1 // pred_check
      _
    $region7: #{tpu_custom_call.1} parent=1 // pred_check_branch
      %25 = sbr.rel (0) target = $region9
    $region8: #{tpu_custom_call.1} parent=1 // pred_region
      %s27 = ssub.s32 64, 64
      %28 = vsyncadd [#allocation6], %s27
      %s30 = sshll.u32 [#allocation5], 4
      %s31 = int_to_ptr.vmem [resolvable:$true] %s30
      %33 = dma.hbm_to_vmem [thread:$0]  %s1, 64, %s31, [#allocation6]
    $region9: #{tpu_custom_call.1} parent=1 // pred_fallthru
      _
    // Predicated region
    $region10: #{tpu_custom_call.1} parent=1 // pred_check
      _
    $region11: #{tpu_custom_call.1} parent=1 // pred_check_branch
      %35 = sbr.rel (0) target = $region13
    $region12: #{tpu_custom_call.1} parent=1 // pred_region
      %s37 = ssub.s32 64, 64
      %38 = vsyncadd [#allocation6], %s37
      %s40 = sshll.u32 [#allocation7], 4
      %s41 = int_to_ptr.vmem [resolvable:$true] %s40
      %43 = dma.hbm_to_vmem [thread:$0]  %s2, 64, %s41, [#allocation6]
    $region13: #{tpu_custom_call.1} parent=1 // pred_fallthru
      _
    // Predicated region
    $region14: #{tpu_custom_call.1} parent=1 // pred_check
      _
    $region15: #{tpu_custom_call.1} parent=1 // pred_check_branch
      %45 = sbr.rel (0) target = $region17
    $region16: #{tpu_custom_call.1} parent=1 // pred_region
      _
    $region17: #{tpu_custom_call.1} parent=1 // pred_fallthru
      _
    // Predicated region
    $region18: #{tpu_custom_call.1} parent=1 // pred_check
      _
    $region19: #{tpu_custom_call.1} parent=1 // pred_check_branch
      %47 = sbr.rel (0) target = $region21
    $region20: #{tpu_custom_call.1} parent=1 // pred_region
      %48 = dma.done [#allocation3], 128
    $region21: #{tpu_custom_call.1} parent=1 // pred_fallthru
      _
    // Predicated region
    $region22: #{tpu_custom_call.1} parent=1 // pred_check
      _
    $region23: #{tpu_custom_call.1} parent=1 // pred_check_branch
      %50 = sbr.rel (0) target = $region25
    $region24: #{tpu_custom_call.1} parent=1 // pred_region
      %51 = dma.done [#allocation6], 64
    $region25: #{tpu_custom_call.1} parent=1 // pred_fallthru
      _
    // Predicated region
    $region26: #{tpu_custom_call.1} parent=1 // pred_check
      _
    $region27: #{tpu_custom_call.1} parent=1 // pred_check_branch
      %53 = sbr.rel (0) target = $region29
    $region28: #{tpu_custom_call.1} parent=1 // pred_region
      %54 = dma.done [#allocation6], 64
    $region29: #{tpu_custom_call.1} parent=1 // pred_fallthru
      _
    %v55 = vlaneseq
    %v56 = vand.u32 %v55, 127
    %57 = vrot.lane.b32.xlu0 %v56, 16
    %v58 = vpop.permute.xlu0 %57
    %vm59 = vcmask 130048
    %v60 = vsel %vm59, %v56, %v58
    %v61 = vld [vmem:[%s3] sm:$0xf]
    %v62 = vld [vmem:[#allocation2] sm:$0xf]
    %s63 = scalar_lea.vmem [#allocation2], 4
    %v64 = vld [vmem:[%s63] sm:$0xf]
    %66 = vrot.lane.b32.xlu0 %v64, 16
    %v67 = vpop.permute.xlu0 %66
    %v69 = vsel %vm59, %v62, %v67
    %71 = vrot.lane.b32.xlu0 %v69, 1
    %v72 = vpop.permute.xlu0 %71
    %vm74 = vcmask 7168
    %v75 = vsel %vm74, 0.0, %v72
    %vm76 = vcmask 269312
    %v77 = vsel %vm76, %v75, 0.0
    %vm78 = vcmp.ge.s32.totalorder %v60, 1
    %vm79 = vcmp.lt.s32.totalorder %v60, 17
    %vm80 = vmand %vm78, %vm79
    %v81 = vsel %vm80, 1, 0
    %v82 = vlaneseq
    %v83 = vshrl.u32 %v82, 7
    %v84 = vsub.s32 0, %v83
    %v85 = vrot.slane %v81, %v84
    %vm86 = vcmp.eq.s32.totalorder %v85, 1
    %v87 = vsel %vm86, %v77, 0.0
    %vm88 = vcmp.ge.s32.totalorder %v60, 4294967295
    %vm89 = vcmp.lt.s32.totalorder %v60, 15
    %vm90 = vmand %vm88, %vm89
    %v91 = vsel %vm90, 1, 0
    %v92 = vlaneseq
    %v93 = vshrl.u32 %v92, 7
    %v94 = vsub.s32 0, %v93
    %v95 = vrot.slane %v91, %v94
    %vm96 = vcmp.eq.s32.totalorder %v95, 1
    %98 = vrot.lane.b32.xlu0 %v77, 126
    %v99 = vpop.permute.xlu0 %98
    %v101 = vsel %vm96, %v99, 0.0
    %v102 = vrot.slane %v77, 4
    %103 = vrot.lane.b32.xlu0 %v102, 127
    %v104 = vpop.permute.xlu0 %103
    %vm106 = vcmask 1043456
    %v107 = vsel %vm106, %v87, %v104
    %v108 = vld [vmem:[#allocation5] sm:$0xf]
    %vm109 = vcmask 97280
    %v111 = vsel %vm109, %v108, 0
    %v114 = vsel %vm106, %v101, 0
    %116 = vmatprep.subr.mxu0 0.0
    %117 = vmatpush1.msra.mxu0 0.0
    %118 = vmatprep.subr.mxu0 0.0
    %119 = vmatpush1.msra.mxu0 0.0
    %120 = vmatprep.subr.mxu0 0.0
    %121 = vmatpush1.msra.mxu0 0.0
    %122 = vmatprep.subr.mxu0 0.0
    %123 = vmatpush1.msra.mxu0 0.0
    %124 = vmatprep.subr.mxu0 0.0
    %125 = vmatpush1.msra.mxu0 0.0
    %126 = vmatprep.subr.mxu0 0.0
    %127 = vmatpush1.msra.mxu0 0.0
    %128 = vmatprep.subr.mxu0 0.0
    %129 = vmatpush1.msra.mxu0 0.0
    %130 = vmatprep.subr.mxu0 0.0
    %131 = vmatpush1.msra.mxu0 0.0
    %132 = vmatprep.subr.mxu0 0.0
    %133 = vmatpush1.msra.mxu0 0.0
    %134 = vmatprep.subr.mxu0 0.0
    %135 = vmatpush1.msra.mxu0 0.0
    %136 = vmatprep.subr.mxu0 0.0
    %137 = vmatpush1.msra.mxu0 0.0
    %138 = vmatprep.subr.mxu0 0.0
    %139 = vmatpush1.msra.mxu0 0.0
    %140 = vmatprep.subr.mxu0 0.0
    %141 = vmatpush1.msra.mxu0 0.0
    %142 = vmatprep.subr.mxu0 0.0
    %143 = vmatpush1.msra.mxu0 0.0
    %144 = vmatprep.subr.mxu0 0.0
    %v145 = vand.u32 %v114, 4294901760
    %146 = vmatpush1.msra.mxu0 %v145
    %147 = vmatprep.subr.mxu0 0.0
    %v148 = vand.u32 %v107, 4294901760
    %149 = vmatpush1.msra.mxu0 %v148
    %150 = vmatprep.subr.mxu0 0.0
    %151 = vmatpush2.msra.mxu0 0.0
    %152 = vmatprep.subr.mxu0 0.0
    %153 = vmatpush2.msra.mxu0 0.0
    %154 = vmatprep.subr.mxu0 0.0
    %155 = vmatpush2.msra.mxu0 0.0
    %156 = vmatprep.subr.mxu0 0.0
    %157 = vmatpush2.msra.mxu0 0.0
    %158 = vmatprep.subr.mxu0 0.0
    %159 = vmatpush2.msra.mxu0 0.0
    %160 = vmatprep.subr.mxu0 0.0
    %161 = vmatpush2.msra.mxu0 0.0
    %162 = vmatprep.subr.mxu0 0.0
    %163 = vmatpush2.msra.mxu0 0.0
    %164 = vmatprep.subr.mxu0 0.0
    %165 = vmatpush2.msra.mxu0 0.0
    %166 = vmatprep.subr.mxu0 0.0
    %167 = vmatpush2.msra.mxu0 0.0
    %168 = vmatprep.subr.mxu0 0.0
    %169 = vmatpush2.msra.mxu0 0.0
    %170 = vmatprep.subr.mxu0 0.0
    %171 = vmatpush2.msra.mxu0 0.0
    %172 = vmatprep.subr.mxu0 0.0
    %173 = vmatpush2.msra.mxu0 0.0
    %174 = vmatprep.subr.mxu0 0.0
    %175 = vmatpush2.msra.mxu0 0.0
    %176 = vmatprep.subr.mxu0 0.0
    %177 = vmatpush2.msra.mxu0 0.0
    %178 = vmatprep.subr.mxu0 0.0
    %179 = vmatpush2.msra.mxu0 0.0
    %180 = vmatprep.subr.mxu0 0.0
    %181 = vmatpush2.msra.mxu0 0.0
    %182 = vmatprep.mubr.f32.mxu0 0.0
    %v183 = vand.u32 %v111, 4294901760
    %v184 = vsub.f32 %v111, %v183
    %v185 = vand.u32 %v184, 4294901760
    %v186 = vsub.f32 %v184, %v185
    %v187 = vand.u32 %v186, 4294901760
    %188 = vmatmul.mubr.f32.gmra.mxu0 %v187
    %v189 = vpop.f32.mrf.mxu0
    %v190 = vadd.f32 0.0, %v189
    %v191 = vpop.f32.mrf.mxu0
    %192 = vdwg.mxu0
    %193 = vmatprep.subr.mxu0 0.0
    %194 = vmatpush1.msra.mxu0 0.0
    %195 = vmatprep.subr.mxu0 0.0
    %196 = vmatpush1.msra.mxu0 0.0
    %197 = vmatprep.subr.mxu0 0.0
    %198 = vmatpush1.msra.mxu0 0.0
    %199 = vmatprep.subr.mxu0 0.0
    %200 = vmatpush1.msra.mxu0 0.0
    %201 = vmatprep.subr.mxu0 0.0
    %202 = vmatpush1.msra.mxu0 0.0
    %203 = vmatprep.subr.mxu0 0.0
    %204 = vmatpush1.msra.mxu0 0.0
    %205 = vmatprep.subr.mxu0 0.0
    %206 = vmatpush1.msra.mxu0 0.0
    %207 = vmatprep.subr.mxu0 0.0
    %208 = vmatpush1.msra.mxu0 0.0
    %209 = vmatprep.subr.mxu0 0.0
    %210 = vmatpush1.msra.mxu0 0.0
    %211 = vmatprep.subr.mxu0 0.0
    %212 = vmatpush1.msra.mxu0 0.0
    %213 = vmatprep.subr.mxu0 0.0
    %214 = vmatpush1.msra.mxu0 0.0
    %215 = vmatprep.subr.mxu0 0.0
    %216 = vmatpush1.msra.mxu0 0.0
    %217 = vmatprep.subr.mxu0 0.0
    %218 = vmatpush1.msra.mxu0 0.0
    %219 = vmatprep.subr.mxu0 0.0
    %220 = vmatpush1.msra.mxu0 0.0
    %221 = vmatprep.subr.mxu0 0.0
    %v222 = vand.u32 %v114, 4294901760
    %v223 = vsub.f32 %v114, %v222
    %v224 = vand.u32 %v223, 4294901760
    %v225 = vsub.f32 %v223, %v224
    %v226 = vand.u32 %v225, 4294901760
    %227 = vmatpush1.msra.mxu0 %v226
    %228 = vmatprep.subr.mxu0 0.0
    %v229 = vand.u32 %v107, 4294901760
    %v230 = vsub.f32 %v107, %v229
    %v231 = vand.u32 %v230, 4294901760
    %v232 = vsub.f32 %v230, %v231
    %v233 = vand.u32 %v232, 4294901760
    %234 = vmatpush1.msra.mxu0 %v233
    %235 = vmatprep.subr.mxu0 0.0
    %236 = vmatpush2.msra.mxu0 0.0
    %237 = vmatprep.subr.mxu0 0.0
    %238 = vmatpush2.msra.mxu0 0.0
    %239 = vmatprep.subr.mxu0 0.0
    %240 = vmatpush2.msra.mxu0 0.0
    %241 = vmatprep.subr.mxu0 0.0
    %242 = vmatpush2.msra.mxu0 0.0
    %243 = vmatprep.subr.mxu0 0.0
    %244 = vmatpush2.msra.mxu0 0.0
    %245 = vmatprep.subr.mxu0 0.0
    %246 = vmatpush2.msra.mxu0 0.0
    %247 = vmatprep.subr.mxu0 0.0
    %248 = vmatpush2.msra.mxu0 0.0
    %249 = vmatprep.subr.mxu0 0.0
    %250 = vmatpush2.msra.mxu0 0.0
    %251 = vmatprep.subr.mxu0 0.0
    %252 = vmatpush2.msra.mxu0 0.0
    %253 = vmatprep.subr.mxu0 0.0
    %254 = vmatpush2.msra.mxu0 0.0
    %255 = vmatprep.subr.mxu0 0.0
    %256 = vmatpush2.msra.mxu0 0.0
    %257 = vmatprep.subr.mxu0 0.0
    %258 = vmatpush2.msra.mxu0 0.0
    %259 = vmatprep.subr.mxu0 0.0
    %260 = vmatpush2.msra.mxu0 0.0
    %261 = vmatprep.subr.mxu0 0.0
    %262 = vmatpush2.msra.mxu0 0.0
    %263 = vmatprep.subr.mxu0 0.0
    %264 = vmatpush2.msra.mxu0 0.0
    %265 = vmatprep.subr.mxu0 0.0
    %266 = vmatpush2.msra.mxu0 0.0
    %267 = vmatprep.mubr.f32.mxu0 0.0
    %v268 = vand.u32 %v111, 4294901760
    %269 = vmatmul.mubr.f32.gmra.mxu0 %v268
    %v270 = vpop.f32.mrf.mxu0
    %v271 = vadd.f32 %v190, %v270
    %v272 = vpop.f32.mrf.mxu0
    %273 = vdwg.mxu0
    %274 = vmatprep.subr.mxu0 0.0
    %275 = vmatpush1.msra.mxu0 0.0
    %276 = vmatprep.subr.mxu0 0.0
    %277 = vmatpush1.msra.mxu0 0.0
    %278 = vmatprep.subr.mxu0 0.0
    %279 = vmatpush1.msra.mxu0 0.0
    %280 = vmatprep.subr.mxu0 0.0
    %281 = vmatpush1.msra.mxu0 0.0
    %282 = vmatprep.subr.mxu0 0.0
    %283 = vmatpush1.msra.mxu0 0.0
    %284 = vmatprep.subr.mxu0 0.0
    %285 = vmatpush1.msra.mxu0 0.0
    %286 = vmatprep.subr.mxu0 0.0
    %287 = vmatpush1.msra.mxu0 0.0
    %288 = vmatprep.subr.mxu0 0.0
    %289 = vmatpush1.msra.mxu0 0.0
    %290 = vmatprep.subr.mxu0 0.0
    %291 = vmatpush1.msra.mxu0 0.0
    %292 = vmatprep.subr.mxu0 0.0
    %293 = vmatpush1.msra.mxu0 0.0
    %294 = vmatprep.subr.mxu0 0.0
    %295 = vmatpush1.msra.mxu0 0.0
    %296 = vmatprep.subr.mxu0 0.0
    %297 = vmatpush1.msra.mxu0 0.0
    %298 = vmatprep.subr.mxu0 0.0
    %299 = vmatpush1.msra.mxu0 0.0
    %300 = vmatprep.subr.mxu0 0.0
    %301 = vmatpush1.msra.mxu0 0.0
    %302 = vmatprep.subr.mxu0 0.0
    %v303 = vand.u32 %v114, 4294901760
    %v304 = vsub.f32 %v114, %v303
    %305 = vmatpush1.msra.mxu0 %v304
    %306 = vmatprep.subr.mxu0 0.0
    %v307 = vand.u32 %v107, 4294901760
    %v308 = vsub.f32 %v107, %v307
    %309 = vmatpush1.msra.mxu0 %v308
    %310 = vmatprep.subr.mxu0 0.0
    %311 = vmatpush2.msra.mxu0 0.0
    %312 = vmatprep.subr.mxu0 0.0
    %313 = vmatpush2.msra.mxu0 0.0
    %314 = vmatprep.subr.mxu0 0.0
    %315 = vmatpush2.msra.mxu0 0.0
    %316 = vmatprep.subr.mxu0 0.0
    %317 = vmatpush2.msra.mxu0 0.0
    %318 = vmatprep.subr.mxu0 0.0
    %319 = vmatpush2.msra.mxu0 0.0
    %320 = vmatprep.subr.mxu0 0.0
    %321 = vmatpush2.msra.mxu0 0.0
    %322 = vmatprep.subr.mxu0 0.0
    %323 = vmatpush2.msra.mxu0 0.0
    %324 = vmatprep.subr.mxu0 0.0
    %325 = vmatpush2.msra.mxu0 0.0
    %326 = vmatprep.subr.mxu0 0.0
    %327 = vmatpush2.msra.mxu0 0.0
    %328 = vmatprep.subr.mxu0 0.0
    %329 = vmatpush2.msra.mxu0 0.0
    %330 = vmatprep.subr.mxu0 0.0
    %331 = vmatpush2.msra.mxu0 0.0
    %332 = vmatprep.subr.mxu0 0.0
    %333 = vmatpush2.msra.mxu0 0.0
    %334 = vmatprep.subr.mxu0 0.0
    %335 = vmatpush2.msra.mxu0 0.0
    %336 = vmatprep.subr.mxu0 0.0
    %337 = vmatpush2.msra.mxu0 0.0
    %338 = vmatprep.subr.mxu0 0.0
    %339 = vmatpush2.msra.mxu0 0.0
    %340 = vmatprep.subr.mxu0 0.0
    %341 = vmatpush2.msra.mxu0 0.0
    %342 = vmatprep.mubr.f32.mxu0 0.0
    %v343 = vand.u32 %v111, 4294901760
    %v344 = vsub.f32 %v111, %v343
    %345 = vmatmul.mubr.f32.gmra.mxu0 %v344
    %v346 = vpop.f32.mrf.mxu0
    %v347 = vadd.f32 %v271, %v346
    %v348 = vpop.f32.mrf.mxu0
    %349 = vdwg.mxu0
    %350 = vmatprep.subr.mxu0 0.0
    %351 = vmatpush1.msra.mxu0 0.0
    %352 = vmatprep.subr.mxu0 0.0
    %353 = vmatpush1.msra.mxu0 0.0
    %354 = vmatprep.subr.mxu0 0.0
    %355 = vmatpush1.msra.mxu0 0.0
    %356 = vmatprep.subr.mxu0 0.0
    %357 = vmatpush1.msra.mxu0 0.0
    %358 = vmatprep.subr.mxu0 0.0
    %359 = vmatpush1.msra.mxu0 0.0
    %360 = vmatprep.subr.mxu0 0.0
    %361 = vmatpush1.msra.mxu0 0.0
    %362 = vmatprep.subr.mxu0 0.0
    %363 = vmatpush1.msra.mxu0 0.0
    %364 = vmatprep.subr.mxu0 0.0
    %365 = vmatpush1.msra.mxu0 0.0
    %366 = vmatprep.subr.mxu0 0.0
    %367 = vmatpush1.msra.mxu0 0.0
    %368 = vmatprep.subr.mxu0 0.0
    %369 = vmatpush1.msra.mxu0 0.0
    %370 = vmatprep.subr.mxu0 0.0
    %371 = vmatpush1.msra.mxu0 0.0
    %372 = vmatprep.subr.mxu0 0.0
    %373 = vmatpush1.msra.mxu0 0.0
    %374 = vmatprep.subr.mxu0 0.0
    %375 = vmatpush1.msra.mxu0 0.0
    %376 = vmatprep.subr.mxu0 0.0
    %377 = vmatpush1.msra.mxu0 0.0
    %378 = vmatprep.subr.mxu0 0.0
    %v379 = vand.u32 %v114, 4294901760
    %380 = vmatpush1.msra.mxu0 %v379
    %381 = vmatprep.subr.mxu0 0.0
    %v382 = vand.u32 %v107, 4294901760
    %383 = vmatpush1.msra.mxu0 %v382
    %384 = vmatprep.subr.mxu0 0.0
    %385 = vmatpush2.msra.mxu0 0.0
    %386 = vmatprep.subr.mxu0 0.0
    %387 = vmatpush2.msra.mxu0 0.0
    %388 = vmatprep.subr.mxu0 0.0
    %389 = vmatpush2.msra.mxu0 0.0
    %390 = vmatprep.subr.mxu0 0.0
    %391 = vmatpush2.msra.mxu0 0.0
    %392 = vmatprep.subr.mxu0 0.0
    %393 = vmatpush2.msra.mxu0 0.0
    %394 = vmatprep.subr.mxu0 0.0
    %395 = vmatpush2.msra.mxu0 0.0
    %396 = vmatprep.subr.mxu0 0.0
    %397 = vmatpush2.msra.mxu0 0.0
    %398 = vmatprep.subr.mxu0 0.0
    %399 = vmatpush2.msra.mxu0 0.0
    %400 = vmatprep.subr.mxu0 0.0
    %401 = vmatpush2.msra.mxu0 0.0
    %402 = vmatprep.subr.mxu0 0.0
    %403 = vmatpush2.msra.mxu0 0.0
    %404 = vmatprep.subr.mxu0 0.0
    %405 = vmatpush2.msra.mxu0 0.0
    %406 = vmatprep.subr.mxu0 0.0
    %407 = vmatpush2.msra.mxu0 0.0
    %408 = vmatprep.subr.mxu0 0.0
    %409 = vmatpush2.msra.mxu0 0.0
    %410 = vmatprep.subr.mxu0 0.0
    %411 = vmatpush2.msra.mxu0 0.0
    %412 = vmatprep.subr.mxu0 0.0
    %413 = vmatpush2.msra.mxu0 0.0
    %414 = vmatprep.subr.mxu0 0.0
    %415 = vmatpush2.msra.mxu0 0.0
    %416 = vmatprep.mubr.f32.mxu0 0.0
    %v417 = vand.u32 %v111, 4294901760
    %v418 = vsub.f32 %v111, %v417
    %v419 = vand.u32 %v418, 4294901760
    %420 = vmatmul.mubr.f32.gmra.mxu0 %v419
    %v421 = vpop.f32.mrf.mxu0
    %v422 = vadd.f32 %v347, %v421
    %v423 = vpop.f32.mrf.mxu0
    %424 = vdwg.mxu0
    %425 = vmatprep.subr.mxu0 0.0
    %426 = vmatpush1.msra.mxu0 0.0
    %427 = vmatprep.subr.mxu0 0.0
    %428 = vmatpush1.msra.mxu0 0.0
    %429 = vmatprep.subr.mxu0 0.0
    %430 = vmatpush1.msra.mxu0 0.0
    %431 = vmatprep.subr.mxu0 0.0
    %432 = vmatpush1.msra.mxu0 0.0
    %433 = vmatprep.subr.mxu0 0.0
    %434 = vmatpush1.msra.mxu0 0.0
    %435 = vmatprep.subr.mxu0 0.0
    %436 = vmatpush1.msra.mxu0 0.0
    %437 = vmatprep.subr.mxu0 0.0
    %438 = vmatpush1.msra.mxu0 0.0
    %439 = vmatprep.subr.mxu0 0.0
    %440 = vmatpush1.msra.mxu0 0.0
    %441 = vmatprep.subr.mxu0 0.0
    %442 = vmatpush1.msra.mxu0 0.0
    %443 = vmatprep.subr.mxu0 0.0
    %444 = vmatpush1.msra.mxu0 0.0
    %445 = vmatprep.subr.mxu0 0.0
    %446 = vmatpush1.msra.mxu0 0.0
    %447 = vmatprep.subr.mxu0 0.0
    %448 = vmatpush1.msra.mxu0 0.0
    %449 = vmatprep.subr.mxu0 0.0
    %450 = vmatpush1.msra.mxu0 0.0
    %451 = vmatprep.subr.mxu0 0.0
    %452 = vmatpush1.msra.mxu0 0.0
    %453 = vmatprep.subr.mxu0 0.0
    %v454 = vand.u32 %v114, 4294901760
    %v455 = vsub.f32 %v114, %v454
    %v456 = vand.u32 %v455, 4294901760
    %457 = vmatpush1.msra.mxu0 %v456
    %458 = vmatprep.subr.mxu0 0.0
    %v459 = vand.u32 %v107, 4294901760
    %v460 = vsub.f32 %v107, %v459
    %v461 = vand.u32 %v460, 4294901760
    %462 = vmatpush1.msra.mxu0 %v461
    %463 = vmatprep.subr.mxu0 0.0
    %464 = vmatpush2.msra.mxu0 0.0
    %465 = vmatprep.subr.mxu0 0.0
    %466 = vmatpush2.msra.mxu0 0.0
    %467 = vmatprep.subr.mxu0 0.0
    %468 = vmatpush2.msra.mxu0 0.0
    %469 = vmatprep.subr.mxu0 0.0
    %470 = vmatpush2.msra.mxu0 0.0
    %471 = vmatprep.subr.mxu0 0.0
    %472 = vmatpush2.msra.mxu0 0.0
    %473 = vmatprep.subr.mxu0 0.0
    %474 = vmatpush2.msra.mxu0 0.0
    %475 = vmatprep.subr.mxu0 0.0
    %476 = vmatpush2.msra.mxu0 0.0
    %477 = vmatprep.subr.mxu0 0.0
    %478 = vmatpush2.msra.mxu0 0.0
    %479 = vmatprep.subr.mxu0 0.0
    %480 = vmatpush2.msra.mxu0 0.0
    %481 = vmatprep.subr.mxu0 0.0
    %482 = vmatpush2.msra.mxu0 0.0
    %483 = vmatprep.subr.mxu0 0.0
    %484 = vmatpush2.msra.mxu0 0.0
    %485 = vmatprep.subr.mxu0 0.0
    %486 = vmatpush2.msra.mxu0 0.0
    %487 = vmatprep.subr.mxu0 0.0
    %488 = vmatpush2.msra.mxu0 0.0
    %489 = vmatprep.subr.mxu0 0.0
    %490 = vmatpush2.msra.mxu0 0.0
    %491 = vmatprep.subr.mxu0 0.0
    %492 = vmatpush2.msra.mxu0 0.0
    %493 = vmatprep.subr.mxu0 0.0
    %494 = vmatpush2.msra.mxu0 0.0
    %495 = vmatprep.mubr.f32.mxu0 0.0
    %v496 = vand.u32 %v111, 4294901760
    %497 = vmatmul.mubr.f32.gmra.mxu0 %v496
    %v498 = vpop.f32.mrf.mxu0
    %v499 = vadd.f32 %v422, %v498
    %v500 = vpop.f32.mrf.mxu0
    %501 = vdwg.mxu0
    %502 = vmatprep.subr.mxu0 0.0
    %503 = vmatpush1.msra.mxu0 0.0
    %504 = vmatprep.subr.mxu0 0.0
    %505 = vmatpush1.msra.mxu0 0.0
    %506 = vmatprep.subr.mxu0 0.0
    %507 = vmatpush1.msra.mxu0 0.0
    %508 = vmatprep.subr.mxu0 0.0
    %509 = vmatpush1.msra.mxu0 0.0
    %510 = vmatprep.subr.mxu0 0.0
    %511 = vmatpush1.msra.mxu0 0.0
    %512 = vmatprep.subr.mxu0 0.0
    %513 = vmatpush1.msra.mxu0 0.0
    %514 = vmatprep.subr.mxu0 0.0
    %515 = vmatpush1.msra.mxu0 0.0
    %516 = vmatprep.subr.mxu0 0.0
    %517 = vmatpush1.msra.mxu0 0.0
    %518 = vmatprep.subr.mxu0 0.0
    %519 = vmatpush1.msra.mxu0 0.0
    %520 = vmatprep.subr.mxu0 0.0
    %521 = vmatpush1.msra.mxu0 0.0
    %522 = vmatprep.subr.mxu0 0.0
    %523 = vmatpush1.msra.mxu0 0.0
    %524 = vmatprep.subr.mxu0 0.0
    %525 = vmatpush1.msra.mxu0 0.0
    %526 = vmatprep.subr.mxu0 0.0
    %527 = vmatpush1.msra.mxu0 0.0
    %528 = vmatprep.subr.mxu0 0.0
    %529 = vmatpush1.msra.mxu0 0.0
    %530 = vmatprep.subr.mxu0 0.0
    %v531 = vand.u32 %v114, 4294901760
    %532 = vmatpush1.msra.mxu0 %v531
    %533 = vmatprep.subr.mxu0 0.0
    %v534 = vand.u32 %v107, 4294901760
    %535 = vmatpush1.msra.mxu0 %v534
    %536 = vmatprep.subr.mxu0 0.0
    %537 = vmatpush2.msra.mxu0 0.0
    %538 = vmatprep.subr.mxu0 0.0
    %539 = vmatpush2.msra.mxu0 0.0
    %540 = vmatprep.subr.mxu0 0.0
    %541 = vmatpush2.msra.mxu0 0.0
    %542 = vmatprep.subr.mxu0 0.0
    %543 = vmatpush2.msra.mxu0 0.0
    %544 = vmatprep.subr.mxu0 0.0
    %545 = vmatpush2.msra.mxu0 0.0
    %546 = vmatprep.subr.mxu0 0.0
    %547 = vmatpush2.msra.mxu0 0.0
    %548 = vmatprep.subr.mxu0 0.0
    %549 = vmatpush2.msra.mxu0 0.0
    %550 = vmatprep.subr.mxu0 0.0
    %551 = vmatpush2.msra.mxu0 0.0
    %552 = vmatprep.subr.mxu0 0.0
    %553 = vmatpush2.msra.mxu0 0.0
    %554 = vmatprep.subr.mxu0 0.0
    %555 = vmatpush2.msra.mxu0 0.0
    %556 = vmatprep.subr.mxu0 0.0
    %557 = vmatpush2.msra.mxu0 0.0
    %558 = vmatprep.subr.mxu0 0.0
    %559 = vmatpush2.msra.mxu0 0.0
    %560 = vmatprep.subr.mxu0 0.0
    %561 = vmatpush2.msra.mxu0 0.0
    %562 = vmatprep.subr.mxu0 0.0
    %563 = vmatpush2.msra.mxu0 0.0
    %564 = vmatprep.subr.mxu0 0.0
    %565 = vmatpush2.msra.mxu0 0.0
    %566 = vmatprep.subr.mxu0 0.0
    %567 = vmatpush2.msra.mxu0 0.0
    %568 = vmatprep.mubr.f32.mxu0 0.0
    %v569 = vand.u32 %v111, 4294901760
    %570 = vmatmul.mubr.f32.gmra.mxu0 %v569
    %v571 = vpop.f32.mrf.mxu0
    %v572 = vadd.f32 %v499, %v571
    %v573 = vpop.f32.mrf.mxu0
    %574 = vdwg.mxu0
    %vm575 = vcmask 257024
    %v576 = vsel %vm575, %v572, 0.0
    %577 = vadd.xlane.f32.xlu0 %v576
    %v578 = vpop.xlane.xlu0 %577
    %v579 = vrcp.pop 32.0
    %v580 = vmul.f32 %v578, %v579
    %v581 = vsub.f32 %v572, %v580
    %v582 = vmul.f32 %v581, %v581
    %v583 = vsel %vm575, %v582, 0.0
    %584 = vadd.xlane.f32.xlu0 %v583
    %v585 = vpop.xlane.xlu0 %584
    %v586 = vmul.f32 %v585, %v579
    %v587 = vadd.f32 %v586, 1e-05
    %v588 = vrsqrt.pop %v587
    %v589 = vmul.f32 %v61, %v588
    %v590 = vmul.f32 %v580, %v589
    %592 = vrot.lane.b32.xlu0 %v590, 1
    %v593 = vpop.permute.xlu0 %592
    %v595 = vsub.f32 %v61, %v593
    %597 = vset.pattern.permute.xlu0 0
    %598 = vperm.xlu0 %597, %v589
    %v599 = vpop.permute.xlu0 %598
    %v601 = vmul.f32 %v572, %v599
    %603 = vset.pattern.permute.xlu0 1
    %604 = vperm.xlu0 %603, %v595
    %v605 = vpop.permute.xlu0 %604
    %v607 = vadd.f32 %v601, %v605
    %v608 = vmax.f32 %v607, 0.0
    %610 = vrot.lane.b32.xlu0 %v608, 1
    %v611 = vpop.permute.xlu0 %610
    %v613 = vsel %vm74, 0.0, %v611
    %v614 = vsel %vm76, %v613, 0.0
    %v615 = vsel %vm86, %v614, 0.0
    %617 = vrot.lane.b32.xlu0 %v614, 126
    %v618 = vpop.permute.xlu0 %617
    %v620 = vsel %vm96, %v618, 0.0
    %v621 = vrot.slane %v614, 4
    %622 = vrot.lane.b32.xlu0 %v621, 127
    %v623 = vpop.permute.xlu0 %622
    %v625 = vsel %vm106, %v615, %v623
    %v626 = vld [vmem:[#allocation7] sm:$0xf]
    %v628 = vsel %vm109, %v626, 0
    %v631 = vsel %vm106, %v620, 0
    %633 = vmatprep.subr.mxu0 0.0
    %634 = vmatpush1.msra.mxu0 0.0
    %635 = vmatprep.subr.mxu0 0.0
    %636 = vmatpush1.msra.mxu0 0.0
    %637 = vmatprep.subr.mxu0 0.0
    %638 = vmatpush1.msra.mxu0 0.0
    %639 = vmatprep.subr.mxu0 0.0
    %640 = vmatpush1.msra.mxu0 0.0
    %641 = vmatprep.subr.mxu0 0.0
    %642 = vmatpush1.msra.mxu0 0.0
    %643 = vmatprep.subr.mxu0 0.0
    %644 = vmatpush1.msra.mxu0 0.0
    %645 = vmatprep.subr.mxu0 0.0
    %646 = vmatpush1.msra.mxu0 0.0
    %647 = vmatprep.subr.mxu0 0.0
    %648 = vmatpush1.msra.mxu0 0.0
    %649 = vmatprep.subr.mxu0 0.0
    %650 = vmatpush1.msra.mxu0 0.0
    %651 = vmatprep.subr.mxu0 0.0
    %652 = vmatpush1.msra.mxu0 0.0
    %653 = vmatprep.subr.mxu0 0.0
    %654 = vmatpush1.msra.mxu0 0.0
    %655 = vmatprep.subr.mxu0 0.0
    %656 = vmatpush1.msra.mxu0 0.0
    %657 = vmatprep.subr.mxu0 0.0
    %658 = vmatpush1.msra.mxu0 0.0
    %659 = vmatprep.subr.mxu0 0.0
    %660 = vmatpush1.msra.mxu0 0.0
    %661 = vmatprep.subr.mxu0 0.0
    %v662 = vand.u32 %v631, 4294901760
    %663 = vmatpush1.msra.mxu0 %v662
    %664 = vmatprep.subr.mxu0 0.0
    %v665 = vand.u32 %v625, 4294901760
    %666 = vmatpush1.msra.mxu0 %v665
    %667 = vmatprep.subr.mxu0 0.0
    %668 = vmatpush2.msra.mxu0 0.0
    %669 = vmatprep.subr.mxu0 0.0
    %670 = vmatpush2.msra.mxu0 0.0
    %671 = vmatprep.subr.mxu0 0.0
    %672 = vmatpush2.msra.mxu0 0.0
    %673 = vmatprep.subr.mxu0 0.0
    %674 = vmatpush2.msra.mxu0 0.0
    %675 = vmatprep.subr.mxu0 0.0
    %676 = vmatpush2.msra.mxu0 0.0
    %677 = vmatprep.subr.mxu0 0.0
    %678 = vmatpush2.msra.mxu0 0.0
    %679 = vmatprep.subr.mxu0 0.0
    %680 = vmatpush2.msra.mxu0 0.0
    %681 = vmatprep.subr.mxu0 0.0
    %682 = vmatpush2.msra.mxu0 0.0
    %683 = vmatprep.subr.mxu0 0.0
    %684 = vmatpush2.msra.mxu0 0.0
    %685 = vmatprep.subr.mxu0 0.0
    %686 = vmatpush2.msra.mxu0 0.0
    %687 = vmatprep.subr.mxu0 0.0
    %688 = vmatpush2.msra.mxu0 0.0
    %689 = vmatprep.subr.mxu0 0.0
    %690 = vmatpush2.msra.mxu0 0.0
    %691 = vmatprep.subr.mxu0 0.0
    %692 = vmatpush2.msra.mxu0 0.0
    %693 = vmatprep.subr.mxu0 0.0
    %694 = vmatpush2.msra.mxu0 0.0
    %695 = vmatprep.subr.mxu0 0.0
    %696 = vmatpush2.msra.mxu0 0.0
    %697 = vmatprep.subr.mxu0 0.0
    %698 = vmatpush2.msra.mxu0 0.0
    %699 = vmatprep.mubr.f32.mxu0 0.0
    %v700 = vand.u32 %v628, 4294901760
    %v701 = vsub.f32 %v628, %v700
    %v702 = vand.u32 %v701, 4294901760
    %v703 = vsub.f32 %v701, %v702
    %v704 = vand.u32 %v703, 4294901760
    %705 = vmatmul.mubr.f32.gmra.mxu0 %v704
    %v706 = vpop.f32.mrf.mxu0
    %v707 = vadd.f32 0.0, %v706
    %v708 = vpop.f32.mrf.mxu0
    %709 = vdwg.mxu0
    %710 = vmatprep.subr.mxu0 0.0
    %711 = vmatpush1.msra.mxu0 0.0
    %712 = vmatprep.subr.mxu0 0.0
    %713 = vmatpush1.msra.mxu0 0.0
    %714 = vmatprep.subr.mxu0 0.0
    %715 = vmatpush1.msra.mxu0 0.0
    %716 = vmatprep.subr.mxu0 0.0
    %717 = vmatpush1.msra.mxu0 0.0
    %718 = vmatprep.subr.mxu0 0.0
    %719 = vmatpush1.msra.mxu0 0.0
    %720 = vmatprep.subr.mxu0 0.0
    %721 = vmatpush1.msra.mxu0 0.0
    %722 = vmatprep.subr.mxu0 0.0
    %723 = vmatpush1.msra.mxu0 0.0
    %724 = vmatprep.subr.mxu0 0.0
    %725 = vmatpush1.msra.mxu0 0.0
    %726 = vmatprep.subr.mxu0 0.0
    %727 = vmatpush1.msra.mxu0 0.0
    %728 = vmatprep.subr.mxu0 0.0
    %729 = vmatpush1.msra.mxu0 0.0
    %730 = vmatprep.subr.mxu0 0.0
    %731 = vmatpush1.msra.mxu0 0.0
    %732 = vmatprep.subr.mxu0 0.0
    %733 = vmatpush1.msra.mxu0 0.0
    %734 = vmatprep.subr.mxu0 0.0
    %735 = vmatpush1.msra.mxu0 0.0
    %736 = vmatprep.subr.mxu0 0.0
    %737 = vmatpush1.msra.mxu0 0.0
    %738 = vmatprep.subr.mxu0 0.0
    %v739 = vand.u32 %v631, 4294901760
    %v740 = vsub.f32 %v631, %v739
    %v741 = vand.u32 %v740, 4294901760
    %v742 = vsub.f32 %v740, %v741
    %v743 = vand.u32 %v742, 4294901760
    %744 = vmatpush1.msra.mxu0 %v743
    %745 = vmatprep.subr.mxu0 0.0
    %v746 = vand.u32 %v625, 4294901760
    %v747 = vsub.f32 %v625, %v746
    %v748 = vand.u32 %v747, 4294901760
    %v749 = vsub.f32 %v747, %v748
    %v750 = vand.u32 %v749, 4294901760
    %751 = vmatpush1.msra.mxu0 %v750
    %752 = vmatprep.subr.mxu0 0.0
    %753 = vmatpush2.msra.mxu0 0.0
    %754 = vmatprep.subr.mxu0 0.0
    %755 = vmatpush2.msra.mxu0 0.0
    %756 = vmatprep.subr.mxu0 0.0
    %757 = vmatpush2.msra.mxu0 0.0
    %758 = vmatprep.subr.mxu0 0.0
    %759 = vmatpush2.msra.mxu0 0.0
    %760 = vmatprep.subr.mxu0 0.0
    %761 = vmatpush2.msra.mxu0 0.0
    %762 = vmatprep.subr.mxu0 0.0
    %763 = vmatpush2.msra.mxu0 0.0
    %764 = vmatprep.subr.mxu0 0.0
    %765 = vmatpush2.msra.mxu0 0.0
    %766 = vmatprep.subr.mxu0 0.0
    %767 = vmatpush2.msra.mxu0 0.0
    %768 = vmatprep.subr.mxu0 0.0
    %769 = vmatpush2.msra.mxu0 0.0
    %770 = vmatprep.subr.mxu0 0.0
    %771 = vmatpush2.msra.mxu0 0.0
    %772 = vmatprep.subr.mxu0 0.0
    %773 = vmatpush2.msra.mxu0 0.0
    %774 = vmatprep.subr.mxu0 0.0
    %775 = vmatpush2.msra.mxu0 0.0
    %776 = vmatprep.subr.mxu0 0.0
    %777 = vmatpush2.msra.mxu0 0.0
    %778 = vmatprep.subr.mxu0 0.0
    %779 = vmatpush2.msra.mxu0 0.0
    %780 = vmatprep.subr.mxu0 0.0
    %781 = vmatpush2.msra.mxu0 0.0
    %782 = vmatprep.subr.mxu0 0.0
    %783 = vmatpush2.msra.mxu0 0.0
    %784 = vmatprep.mubr.f32.mxu0 0.0
    %v785 = vand.u32 %v628, 4294901760
    %786 = vmatmul.mubr.f32.gmra.mxu0 %v785
    %v787 = vpop.f32.mrf.mxu0
    %v788 = vadd.f32 %v707, %v787
    %v789 = vpop.f32.mrf.mxu0
    %790 = vdwg.mxu0
    %791 = vmatprep.subr.mxu0 0.0
    %792 = vmatpush1.msra.mxu0 0.0
    %793 = vmatprep.subr.mxu0 0.0
    %794 = vmatpush1.msra.mxu0 0.0
    %795 = vmatprep.subr.mxu0 0.0
    %796 = vmatpush1.msra.mxu0 0.0
    %797 = vmatprep.subr.mxu0 0.0
    %798 = vmatpush1.msra.mxu0 0.0
    %799 = vmatprep.subr.mxu0 0.0
    %800 = vmatpush1.msra.mxu0 0.0
    %801 = vmatprep.subr.mxu0 0.0
    %802 = vmatpush1.msra.mxu0 0.0
    %803 = vmatprep.subr.mxu0 0.0
    %804 = vmatpush1.msra.mxu0 0.0
    %805 = vmatprep.subr.mxu0 0.0
    %806 = vmatpush1.msra.mxu0 0.0
    %807 = vmatprep.subr.mxu0 0.0
    %808 = vmatpush1.msra.mxu0 0.0
    %809 = vmatprep.subr.mxu0 0.0
    %810 = vmatpush1.msra.mxu0 0.0
    %811 = vmatprep.subr.mxu0 0.0
    %812 = vmatpush1.msra.mxu0 0.0
    %813 = vmatprep.subr.mxu0 0.0
    %814 = vmatpush1.msra.mxu0 0.0
    %815 = vmatprep.subr.mxu0 0.0
    %816 = vmatpush1.msra.mxu0 0.0
    %817 = vmatprep.subr.mxu0 0.0
    %818 = vmatpush1.msra.mxu0 0.0
    %819 = vmatprep.subr.mxu0 0.0
    %v820 = vand.u32 %v631, 4294901760
    %v821 = vsub.f32 %v631, %v820
    %822 = vmatpush1.msra.mxu0 %v821
    %823 = vmatprep.subr.mxu0 0.0
    %v824 = vand.u32 %v625, 4294901760
    %v825 = vsub.f32 %v625, %v824
    %826 = vmatpush1.msra.mxu0 %v825
    %827 = vmatprep.subr.mxu0 0.0
    %828 = vmatpush2.msra.mxu0 0.0
    %829 = vmatprep.subr.mxu0 0.0
    %830 = vmatpush2.msra.mxu0 0.0
    %831 = vmatprep.subr.mxu0 0.0
    %832 = vmatpush2.msra.mxu0 0.0
    %833 = vmatprep.subr.mxu0 0.0
    %834 = vmatpush2.msra.mxu0 0.0
    %835 = vmatprep.subr.mxu0 0.0
    %836 = vmatpush2.msra.mxu0 0.0
    %837 = vmatprep.subr.mxu0 0.0
    %838 = vmatpush2.msra.mxu0 0.0
    %839 = vmatprep.subr.mxu0 0.0
    %840 = vmatpush2.msra.mxu0 0.0
    %841 = vmatprep.subr.mxu0 0.0
    %842 = vmatpush2.msra.mxu0 0.0
    %843 = vmatprep.subr.mxu0 0.0
    %844 = vmatpush2.msra.mxu0 0.0
    %845 = vmatprep.subr.mxu0 0.0
    %846 = vmatpush2.msra.mxu0 0.0
    %847 = vmatprep.subr.mxu0 0.0
    %848 = vmatpush2.msra.mxu0 0.0
    %849 = vmatprep.subr.mxu0 0.0
    %850 = vmatpush2.msra.mxu0 0.0
    %851 = vmatprep.subr.mxu0 0.0
    %852 = vmatpush2.msra.mxu0 0.0
    %853 = vmatprep.subr.mxu0 0.0
    %854 = vmatpush2.msra.mxu0 0.0
    %855 = vmatprep.subr.mxu0 0.0
    %856 = vmatpush2.msra.mxu0 0.0
    %857 = vmatprep.subr.mxu0 0.0
    %858 = vmatpush2.msra.mxu0 0.0
    %859 = vmatprep.mubr.f32.mxu0 0.0
    %v860 = vand.u32 %v628, 4294901760
    %v861 = vsub.f32 %v628, %v860
    %862 = vmatmul.mubr.f32.gmra.mxu0 %v861
    %v863 = vpop.f32.mrf.mxu0
    %v864 = vadd.f32 %v788, %v863
    %v865 = vpop.f32.mrf.mxu0
    %866 = vdwg.mxu0
    %867 = vmatprep.subr.mxu0 0.0
    %868 = vmatpush1.msra.mxu0 0.0
    %869 = vmatprep.subr.mxu0 0.0
    %870 = vmatpush1.msra.mxu0 0.0
    %871 = vmatprep.subr.mxu0 0.0
    %872 = vmatpush1.msra.mxu0 0.0
    %873 = vmatprep.subr.mxu0 0.0
    %874 = vmatpush1.msra.mxu0 0.0
    %875 = vmatprep.subr.mxu0 0.0
    %876 = vmatpush1.msra.mxu0 0.0
    %877 = vmatprep.subr.mxu0 0.0
    %878 = vmatpush1.msra.mxu0 0.0
    %879 = vmatprep.subr.mxu0 0.0
    %880 = vmatpush1.msra.mxu0 0.0
    %881 = vmatprep.subr.mxu0 0.0
    %882 = vmatpush1.msra.mxu0 0.0
    %883 = vmatprep.subr.mxu0 0.0
    %884 = vmatpush1.msra.mxu0 0.0
    %885 = vmatprep.subr.mxu0 0.0
    %886 = vmatpush1.msra.mxu0 0.0
    %887 = vmatprep.subr.mxu0 0.0
    %888 = vmatpush1.msra.mxu0 0.0
    %889 = vmatprep.subr.mxu0 0.0
    %890 = vmatpush1.msra.mxu0 0.0
    %891 = vmatprep.subr.mxu0 0.0
    %892 = vmatpush1.msra.mxu0 0.0
    %893 = vmatprep.subr.mxu0 0.0
    %894 = vmatpush1.msra.mxu0 0.0
    %895 = vmatprep.subr.mxu0 0.0
    %v896 = vand.u32 %v631, 4294901760
    %897 = vmatpush1.msra.mxu0 %v896
    %898 = vmatprep.subr.mxu0 0.0
    %v899 = vand.u32 %v625, 4294901760
    %900 = vmatpush1.msra.mxu0 %v899
    %901 = vmatprep.subr.mxu0 0.0
    %902 = vmatpush2.msra.mxu0 0.0
    %903 = vmatprep.subr.mxu0 0.0
    %904 = vmatpush2.msra.mxu0 0.0
    %905 = vmatprep.subr.mxu0 0.0
    %906 = vmatpush2.msra.mxu0 0.0
    %907 = vmatprep.subr.mxu0 0.0
    %908 = vmatpush2.msra.mxu0 0.0
    %909 = vmatprep.subr.mxu0 0.0
    %910 = vmatpush2.msra.mxu0 0.0
    %911 = vmatprep.subr.mxu0 0.0
    %912 = vmatpush2.msra.mxu0 0.0
    %913 = vmatprep.subr.mxu0 0.0
    %914 = vmatpush2.msra.mxu0 0.0
    %915 = vmatprep.subr.mxu0 0.0
    %916 = vmatpush2.msra.mxu0 0.0
    %917 = vmatprep.subr.mxu0 0.0
    %918 = vmatpush2.msra.mxu0 0.0
    %919 = vmatprep.subr.mxu0 0.0
    %920 = vmatpush2.msra.mxu0 0.0
    %921 = vmatprep.subr.mxu0 0.0
    %922 = vmatpush2.msra.mxu0 0.0
    %923 = vmatprep.subr.mxu0 0.0
    %924 = vmatpush2.msra.mxu0 0.0
    %925 = vmatprep.subr.mxu0 0.0
    %926 = vmatpush2.msra.mxu0 0.0
    %927 = vmatprep.subr.mxu0 0.0
    %928 = vmatpush2.msra.mxu0 0.0
    %929 = vmatprep.subr.mxu0 0.0
    %930 = vmatpush2.msra.mxu0 0.0
    %931 = vmatprep.subr.mxu0 0.0
    %932 = vmatpush2.msra.mxu0 0.0
    %933 = vmatprep.mubr.f32.mxu0 0.0
    %v934 = vand.u32 %v628, 4294901760
    %v935 = vsub.f32 %v628, %v934
    %v936 = vand.u32 %v935, 4294901760
    %937 = vmatmul.mubr.f32.gmra.mxu0 %v936
    %v938 = vpop.f32.mrf.mxu0
    %v939 = vadd.f32 %v864, %v938
    %v940 = vpop.f32.mrf.mxu0
    %941 = vdwg.mxu0
    %942 = vmatprep.subr.mxu0 0.0
    %943 = vmatpush1.msra.mxu0 0.0
    %944 = vmatprep.subr.mxu0 0.0
    %945 = vmatpush1.msra.mxu0 0.0
    %946 = vmatprep.subr.mxu0 0.0
    %947 = vmatpush1.msra.mxu0 0.0
    %948 = vmatprep.subr.mxu0 0.0
    %949 = vmatpush1.msra.mxu0 0.0
    %950 = vmatprep.subr.mxu0 0.0
    %951 = vmatpush1.msra.mxu0 0.0
    %952 = vmatprep.subr.mxu0 0.0
    %953 = vmatpush1.msra.mxu0 0.0
    %954 = vmatprep.subr.mxu0 0.0
    %955 = vmatpush1.msra.mxu0 0.0
    %956 = vmatprep.subr.mxu0 0.0
    %957 = vmatpush1.msra.mxu0 0.0
    %958 = vmatprep.subr.mxu0 0.0
    %959 = vmatpush1.msra.mxu0 0.0
    %960 = vmatprep.subr.mxu0 0.0
    %961 = vmatpush1.msra.mxu0 0.0
    %962 = vmatprep.subr.mxu0 0.0
    %963 = vmatpush1.msra.mxu0 0.0
    %964 = vmatprep.subr.mxu0 0.0
    %965 = vmatpush1.msra.mxu0 0.0
    %966 = vmatprep.subr.mxu0 0.0
    %967 = vmatpush1.msra.mxu0 0.0
    %968 = vmatprep.subr.mxu0 0.0
    %969 = vmatpush1.msra.mxu0 0.0
    %970 = vmatprep.subr.mxu0 0.0
    %v971 = vand.u32 %v631, 4294901760
    %v972 = vsub.f32 %v631, %v971
    %v973 = vand.u32 %v972, 4294901760
    %974 = vmatpush1.msra.mxu0 %v973
    %975 = vmatprep.subr.mxu0 0.0
    %v976 = vand.u32 %v625, 4294901760
    %v977 = vsub.f32 %v625, %v976
    %v978 = vand.u32 %v977, 4294901760
    %979 = vmatpush1.msra.mxu0 %v978
    %980 = vmatprep.subr.mxu0 0.0
    %981 = vmatpush2.msra.mxu0 0.0
    %982 = vmatprep.subr.mxu0 0.0
    %983 = vmatpush2.msra.mxu0 0.0
    %984 = vmatprep.subr.mxu0 0.0
    %985 = vmatpush2.msra.mxu0 0.0
    %986 = vmatprep.subr.mxu0 0.0
    %987 = vmatpush2.msra.mxu0 0.0
    %988 = vmatprep.subr.mxu0 0.0
    %989 = vmatpush2.msra.mxu0 0.0
    %990 = vmatprep.subr.mxu0 0.0
    %991 = vmatpush2.msra.mxu0 0.0
    %992 = vmatprep.subr.mxu0 0.0
    %993 = vmatpush2.msra.mxu0 0.0
    %994 = vmatprep.subr.mxu0 0.0
    %995 = vmatpush2.msra.mxu0 0.0
    %996 = vmatprep.subr.mxu0 0.0
    %997 = vmatpush2.msra.mxu0 0.0
    %998 = vmatprep.subr.mxu0 0.0
    %999 = vmatpush2.msra.mxu0 0.0
    %1000 = vmatprep.subr.mxu0 0.0
    %1001 = vmatpush2.msra.mxu0 0.0
    %1002 = vmatprep.subr.mxu0 0.0
    %1003 = vmatpush2.msra.mxu0 0.0
    %1004 = vmatprep.subr.mxu0 0.0
    %1005 = vmatpush2.msra.mxu0 0.0
    %1006 = vmatprep.subr.mxu0 0.0
    %1007 = vmatpush2.msra.mxu0 0.0
    %1008 = vmatprep.subr.mxu0 0.0
    %1009 = vmatpush2.msra.mxu0 0.0
    %1010 = vmatprep.subr.mxu0 0.0
    %1011 = vmatpush2.msra.mxu0 0.0
    %1012 = vmatprep.mubr.f32.mxu0 0.0
    %v1013 = vand.u32 %v628, 4294901760
    %1014 = vmatmul.mubr.f32.gmra.mxu0 %v1013
    %v1015 = vpop.f32.mrf.mxu0
    %v1016 = vadd.f32 %v939, %v1015
    %v1017 = vpop.f32.mrf.mxu0
    %1018 = vdwg.mxu0
    %1019 = vmatprep.subr.mxu0 0.0
    %1020 = vmatpush1.msra.mxu0 0.0
    %1021 = vmatprep.subr.mxu0 0.0
    %1022 = vmatpush1.msra.mxu0 0.0
    %1023 = vmatprep.subr.mxu0 0.0
    %1024 = vmatpush1.msra.mxu0 0.0
    %1025 = vmatprep.subr.mxu0 0.0
    %1026 = vmatpush1.msra.mxu0 0.0
    %1027 = vmatprep.subr.mxu0 0.0
    %1028 = vmatpush1.msra.mxu0 0.0
    %1029 = vmatprep.subr.mxu0 0.0
    %1030 = vmatpush1.msra.mxu0 0.0
    %1031 = vmatprep.subr.mxu0 0.0
    %1032 = vmatpush1.msra.mxu0 0.0
    %1033 = vmatprep.subr.mxu0 0.0
    %1034 = vmatpush1.msra.mxu0 0.0
    %1035 = vmatprep.subr.mxu0 0.0
    %1036 = vmatpush1.msra.mxu0 0.0
    %1037 = vmatprep.subr.mxu0 0.0
    %1038 = vmatpush1.msra.mxu0 0.0
    %1039 = vmatprep.subr.mxu0 0.0
    %1040 = vmatpush1.msra.mxu0 0.0
    %1041 = vmatprep.subr.mxu0 0.0
    %1042 = vmatpush1.msra.mxu0 0.0
    %1043 = vmatprep.subr.mxu0 0.0
    %1044 = vmatpush1.msra.mxu0 0.0
    %1045 = vmatprep.subr.mxu0 0.0
    %1046 = vmatpush1.msra.mxu0 0.0
    %1047 = vmatprep.subr.mxu0 0.0
    %v1048 = vand.u32 %v631, 4294901760
    %1049 = vmatpush1.msra.mxu0 %v1048
    %1050 = vmatprep.subr.mxu0 0.0
    %v1051 = vand.u32 %v625, 4294901760
    %1052 = vmatpush1.msra.mxu0 %v1051
    %1053 = vmatprep.subr.mxu0 0.0
    %1054 = vmatpush2.msra.mxu0 0.0
    %1055 = vmatprep.subr.mxu0 0.0
    %1056 = vmatpush2.msra.mxu0 0.0
    %1057 = vmatprep.subr.mxu0 0.0
    %1058 = vmatpush2.msra.mxu0 0.0
    %1059 = vmatprep.subr.mxu0 0.0
    %1060 = vmatpush2.msra.mxu0 0.0
    %1061 = vmatprep.subr.mxu0 0.0
    %1062 = vmatpush2.msra.mxu0 0.0
    %1063 = vmatprep.subr.mxu0 0.0
    %1064 = vmatpush2.msra.mxu0 0.0
    %1065 = vmatprep.subr.mxu0 0.0
    %1066 = vmatpush2.msra.mxu0 0.0
    %1067 = vmatprep.subr.mxu0 0.0
    %1068 = vmatpush2.msra.mxu0 0.0
    %1069 = vmatprep.subr.mxu0 0.0
    %1070 = vmatpush2.msra.mxu0 0.0
    %1071 = vmatprep.subr.mxu0 0.0
    %1072 = vmatpush2.msra.mxu0 0.0
    %1073 = vmatprep.subr.mxu0 0.0
    %1074 = vmatpush2.msra.mxu0 0.0
    %1075 = vmatprep.subr.mxu0 0.0
    %1076 = vmatpush2.msra.mxu0 0.0
    %1077 = vmatprep.subr.mxu0 0.0
    %1078 = vmatpush2.msra.mxu0 0.0
    %1079 = vmatprep.subr.mxu0 0.0
    %1080 = vmatpush2.msra.mxu0 0.0
    %1081 = vmatprep.subr.mxu0 0.0
    %1082 = vmatpush2.msra.mxu0 0.0
    %1083 = vmatprep.subr.mxu0 0.0
    %1084 = vmatpush2.msra.mxu0 0.0
    %1085 = vmatprep.mubr.f32.mxu0 0.0
    %v1086 = vand.u32 %v628, 4294901760
    %1087 = vmatmul.mubr.f32.gmra.mxu0 %v1086
    %v1088 = vpop.f32.mrf.mxu0
    %v1089 = vadd.f32 %v1016, %v1088
    %v1090 = vpop.f32.mrf.mxu0
    %1091 = vdwg.mxu0
    %v1092 = vsel %vm575, %v1089, 0.0
    %1093 = vadd.xlane.f32.xlu0 %v1092
    %v1094 = vpop.xlane.xlu0 %1093
    %v1095 = vmul.f32 %v1094, %v579
    %v1096 = vsub.f32 %v1089, %v1095
    %v1097 = vmul.f32 %v1096, %v1096
    %v1098 = vsel %vm575, %v1097, 0.0
    %1099 = vadd.xlane.f32.xlu0 %v1098
    %v1100 = vpop.xlane.xlu0 %1099
    %v1101 = vmul.f32 %v1100, %v579
    %v1102 = vadd.f32 %v1101, 1e-05
    %v1103 = vrsqrt.pop %v1102
    %v1104 = vmul.f32 %v61, %v1103
    %v1105 = vmul.f32 %v1095, %v1104
    %1107 = vrot.lane.b32.xlu0 %v1105, 1
    %v1108 = vpop.permute.xlu0 %1107
    %v1110 = vsub.f32 %v61, %v1108
    %1112 = vset.pattern.permute.xlu0 2
    %1113 = vperm.xlu0 %1112, %v1104
    %v1114 = vpop.permute.xlu0 %1113
    %v1116 = vmul.f32 %v1089, %v1114
    %1118 = vset.pattern.permute.xlu0 3
    %1119 = vperm.xlu0 %1118, %v1110
    %v1120 = vpop.permute.xlu0 %1119
    %v1122 = vadd.f32 %v1116, %v1120
    %v1123 = vmax.f32 %v1122, 0.0
    %v1124 = vadd.f32 %v69, %v1123
    %vm1125 = vcmask 125952
    %1126 = vst.msk [vmem:[#allocation8] sm:$0xf] %vm1125, %v1124
    %1128 = vrot.lane.b32.xlu0 %v1124, 112
    %v1129 = vpop.permute.xlu0 %1128
    %s1131 = scalar_lea.vmem [#allocation8], 4
    %1132 = vst.msk [vmem:[%s1131] sm:$0xf] %vm1125, %v1129
    // Predicated region
    $region30: #{tpu_custom_call.1} parent=1 // pred_check
      _
    $region31: #{tpu_custom_call.1} parent=1 // pred_check_branch
      %1134 = sbr.rel (0) target = $region33
    $region32: #{tpu_custom_call.1} parent=1 // pred_region
      %s1136 = ssub.s32 128, 128
      %1137 = vsyncadd [#allocation4], %s1136
      %s1138 = sshll.u32 [#allocation8], 4
      %s1139 = int_to_ptr.vmem [resolvable:$true] %s1138
      %1144 = dma.vmem_to_hbm [thread:$0]  %s1139, 128, %s4, [#allocation4], 64, 64, 4
    $region33: #{tpu_custom_call.1} parent=1 // pred_fallthru
      _
    // Predicated region
    $region34: #{tpu_custom_call.1} parent=1 // pred_check
      _
    $region35: #{tpu_custom_call.1} parent=1 // pred_check_branch
      %1146 = sbr.rel (0) target = $region37
    $region36: #{tpu_custom_call.1} parent=1 // pred_region
      %1147 = dma.done [#allocation4], 128
    $region37: #{tpu_custom_call.1} parent=1 // pred_fallthru
      _
    %1148 = vsyncpa [#allocation3], 1
    %1149 = vsyncpa [#allocation6], 1
    %1150 = vsyncpa [#allocation4], 1

</llo_original>
